<compile_context>
chip_gen: v7x
topology: tpu7x:2x2x1
jax: 0.10.0
libtpu: 0.0.40
codegen_flags: <defaults>
</compile_context>

<pallas_src>
import functools

import jax
import jax.numpy as jnp
from jax.experimental import pallas as pl
from jax.experimental.pallas import tpu as pltpu

_LANE = 128     # lane (last-dim) granularity
_SUBLANE = 8    # f32 sublane (second-to-last dim) granularity
_TB_MAX = 512   # max batch-tile rows (see perf review: 256-512, VMEM-bounded)


def _round_up(x, m):
    return ((x + m - 1) // m) * m


def _fused_mlp_kernel(*refs, num_layers: int, apply_relu: bool):
    """Fused MLP forward on one batch tile.

    refs = (x_ref, w0_ref, b0_ref, ..., w{L-1}_ref, b{L-1}_ref, o_ref)
      x_ref : (TB, K0_pad)            f32
      w_i   : (in_pad_i, out_pad_i)   bf16, pre-transposed + zero-padded
      b_i   : (1, out_pad_i)          f32, zero-padded
      o_ref : (TB, out_pad_last)      f32

    Intermediates (<= TB x 128 f32 here) live in vregs/VMEM; nothing touches
    HBM between layers.  Zero-padded lanes stay zero through every layer
    because padded weight rows/cols and bias entries are zero and relu(0)=0.
    """
    x_ref = refs[0]
    o_ref = refs[1 + 2 * num_layers]

    h = x_ref[...].astype(jnp.float32)
    for i in range(num_layers):
        w = refs[1 + 2 * i][...]          # bf16 (in_pad, out_pad): MXU-direct
        b = refs[2 + 2 * i][...]          # f32 (1, out_pad): broadcast add
        h = jnp.dot(h.astype(w.dtype), w,
                    preferred_element_type=jnp.float32) + b
        if apply_relu:
            h = jnp.maximum(h, 0.0)
    o_ref[...] = h.astype(o_ref.dtype)


def fused_mlp(x_pad, params, *, apply_relu: bool, tb: int):
    """Single pallas_call, batch-gridded, all weights VMEM-resident."""
    num_layers = len(params)
    b_pad, k0 = x_pad.shape
    out_pad_last = params[-1][0].shape[1]
    grid = (pl.cdiv(b_pad, tb),)

    flat_args = []
    # x tile: (TB, K0); K0 equals the full array dim so it is exempt from the
    # 128-lane divisibility rule.
    in_specs = [pl.BlockSpec((tb, k0), lambda i: (i, 0))]
    for (w, b) in params:
        flat_args += [w, b]
        # Constant block index across the batch grid + single buffering:
        # weights/bias stay resident in VMEM, no re-DMA, half the footprint.
        in_specs.append(pl.BlockSpec(w.shape, lambda i: (0, 0),
                                     pipeline_mode=pl.Buffered(1)))
        in_specs.append(pl.BlockSpec(b.shape, lambda i: (0, 0),
                                     pipeline_mode=pl.Buffered(1)))
    out_specs = pl.BlockSpec((tb, out_pad_last), lambda i: (i, 0))

    # VMEM budget: resident weights/biases (single-buffered) + double-buffered
    # x/o tiles + activation headroom.  Clamp to 64 MiB (v7x physical VMEM);
    # beyond ~48 MiB of resident weights a tiled-K path is required (TODO).
    weight_bytes = sum(w.size * w.dtype.itemsize + b.size * b.dtype.itemsize
                       for (w, b) in params)
    io_bytes = 2 * tb * k0 * 4 + 2 * tb * out_pad_last * 4
    max_width = max([k0] + [w.shape[1] for (w, _) in params])
    act_bytes = 2 * tb * max_width * 4
    vmem_limit = weight_bytes + io_bytes + act_bytes + (8 << 20)
    vmem_limit = int(min(max(vmem_limit, 32 << 20), 64 << 20))

    kernel = functools.partial(_fused_mlp_kernel,
                               num_layers=num_layers,
                               apply_relu=apply_relu)
    return pl.pallas_call(
        kernel,
        out_shape=jax.ShapeDtypeStruct((b_pad, out_pad_last), x_pad.dtype),
        grid=grid,
        in_specs=in_specs,
        out_specs=out_specs,
        compiler_params=pltpu.CompilerParams(
            dimension_semantics=("parallel",),     # megacore sharding on v7x
            vmem_limit_bytes=vmem_limit),
    )(x_pad, *flat_args)


@functools.partial(jax.jit, static_argnames=("apply_relu", "out_features"))
def _mlp_forward(state, params, *, apply_relu: bool, out_features: int):
    """Jitted pad -> fused Pallas MLP -> slice."""
    batch, feat = state.shape
    k0 = params[0][0].shape[0]                       # layer-0 padded K (mult of 8)

    tb = min(_TB_MAX, _round_up(batch, _SUBLANE))
    b_pad = _round_up(max(batch, _SUBLANE), tb)

    if (b_pad, k0) == (batch, feat):
        x_pad = state
    else:
        x_pad = jnp.zeros((b_pad, k0), state.dtype).at[:batch, :feat].set(state)

    out_pad = fused_mlp(x_pad, params, apply_relu=apply_relu, tb=tb)
    return out_pad[:batch, :out_features]


class MLPPallas:
    """Mirrors baseline MLP: Sequential of Linear(+activation) per layer.

    Activation is applied after EVERY layer (including the last) whenever
    activation != 'linear', exactly as in the reference build_model().
    """

    def __init__(self, init_size=1, num_of_layers=1, num_of_unit=32,
                 activation="relu", key=None, dtype=jnp.float32,
                 mxu_dtype=jnp.bfloat16):
        if activation not in ("relu", "linear"):
            raise NotImplementedError(
                "Only 'relu' and 'linear' activations are implemented; "
                f"got {activation!r}.")
        if isinstance(num_of_unit, int):
            num_of_unit = [num_of_unit]
        self.num_of_unit = list(num_of_unit)
        self.num_of_layers = num_of_layers
        self.activation = activation
        self.init_size = init_size
        self.dtype = dtype

        if key is None:
            key = jax.random.PRNGKey(0)

        # PyTorch-layout params (for reference checks) + kernel-layout params
        # (transposed + padded + bf16-cast once at init; zero per-call cost).
        self.params = []          # [(w: (out, in) f32, b: (1, out) f32), ...]
        padded = []               # [(w_t: (in_pad, out_pad) bf16, b: (1, out_pad) f32)]
        in_size = init_size
        for i in range(num_of_layers):
            out_size = self.num_of_unit[i]
            key, kw, kb = jax.random.split(key, 3)
            bound = 1.0 / float(in_size) ** 0.5       # torch.nn.Linear init bound
            w = jax.random.uniform(kw, (out_size, in_size), dtype,
                                   minval=-bound, maxval=bound)
            b = jax.random.uniform(kb, (1, out_size), dtype,
                                   minval=-bound, maxval=bound)
            self.params.append((w, b))

            # Layer 0: K only padded to the sublane multiple (full-extent last
            # dim of x is exempt from the 128-lane rule).  Later layers' K is
            # the previous layer's 128-padded N.
            if i == 0:
                in_pad = _round_up(max(in_size, 1), _SUBLANE)
            else:
                in_pad = _round_up(max(in_size, 1), _LANE)
            out_pad = _round_up(max(out_size, 1), _LANE)
            w_t = jnp.zeros((in_pad, out_pad), mxu_dtype)
            w_t = w_t.at[:in_size, :out_size].set(w.T.astype(mxu_dtype))
            b_p = jnp.zeros((1, out_pad), jnp.float32).at[:, :out_size].set(
                b.astype(jnp.float32))
            padded.append((w_t, b_p))
            in_size = out_size
        self.padded_params = tuple(padded)

    def __call__(self, state):
        assert state.shape[-1] == self.init_size, "input feature dim mismatch"
        return _mlp_forward(state, self.padded_params,
                            apply_relu=(self.activation != "linear"),
                            out_features=self.num_of_unit[-1])


if __name__ == "__main__":
    key = jax.random.PRNGKey(0)
    k_in, k_model = jax.random.split(key)

    # Small config consistent with the module: 2 layers of 32 units, ReLU.
    batch, init_size = 4, 8
    mlp = MLPPallas(init_size=init_size, num_of_layers=2,
                    num_of_unit=[32, 32], activation="relu", key=k_model)

    x = jax.random.normal(k_in, (batch, init_size), jnp.float32)
    out = mlp(x)
    jax.block_until_ready(out)

    # Plain-JAX reference mirroring the kernel numerics (bf16 MXU inputs,
    # f32 accumulation, f32 bias add + ReLU).
    ref = x
    for (w, b) in mlp.params:
        z = jnp.dot(ref.astype(jnp.bfloat16), w.T.astype(jnp.bfloat16),
                    preferred_element_type=jnp.float32) + b
        ref = jnp.maximum(z, 0.0)

    assert out.shape == (batch, 32)
    assert bool(jnp.all(jnp.isfinite(out)))
    assert jnp.allclose(out, ref, atol=2e-3, rtol=2e-3), (
        float(jnp.max(jnp.abs(out - ref))))

    print("KERNEL_OK")
</pallas_src>

<mosaic_0001>
module attributes {stable_mosaic.version = 11 : i64} {
  func.func @_fused_mlp_kernel(%arg0: i32, %arg1: memref<8x8xf32, #tpu.memory_space<vmem>>, %arg2: memref<8x128xbf16, #tpu.memory_space<vmem>>, %arg3: memref<1x128xf32, #tpu.memory_space<vmem>>, %arg4: memref<128x128xbf16, #tpu.memory_space<vmem>>, %arg5: memref<1x128xf32, #tpu.memory_space<vmem>>, %arg6: memref<8x128xf32, #tpu.memory_space<vmem>>) attributes {dimension_semantics = [#tpu.dimension_semantics<parallel>], iteration_bounds = array<i64: 1>, scalar_prefetch = 0 : i64, scratch_operands = 0 : i64, tpu.core_type = #tpu.core_type<tc>, window_params = [{transform_indices = @transform_0, window_bounds = array<i64: 8, 8>}, {pipeline_mode = #tpu.pipeline_mode<synchronous>, transform_indices = @transform_1, window_bounds = array<i64: 8, 128>}, {pipeline_mode = #tpu.pipeline_mode<synchronous>, transform_indices = @transform_2, window_bounds = array<i64: 1, 128>}, {pipeline_mode = #tpu.pipeline_mode<synchronous>, transform_indices = @transform_3, window_bounds = array<i64: 128, 128>}, {pipeline_mode = #tpu.pipeline_mode<synchronous>, transform_indices = @transform_4, window_bounds = array<i64: 1, 128>}, {transform_indices = @transform_5, window_bounds = array<i64: 8, 128>}]} {
    %c0 = arith.constant 0 : index
    %c0_0 = arith.constant 0 : index
    %0 = vector.load %arg1[%c0, %c0_0] : memref<8x8xf32, #tpu.memory_space<vmem>>, vector<8x8xf32>
    %c0_1 = arith.constant 0 : index
    %c0_2 = arith.constant 0 : index
    %1 = vector.load %arg2[%c0_1, %c0_2] : memref<8x128xbf16, #tpu.memory_space<vmem>>, vector<8x128xbf16>
    %c0_3 = arith.constant 0 : index
    %c0_4 = arith.constant 0 : index
    %2 = vector.load %arg3[%c0_3, %c0_4] : memref<1x128xf32, #tpu.memory_space<vmem>>, vector<1x128xf32>
    %3 = arith.truncf %0 : vector<8x8xf32> to vector<8x8xbf16>
    %cst = arith.constant dense<0.000000e+00> : vector<8x128xf32>
    %4 = tpu.matmul %3, %1, %cst {dimension_numbers = #tpu.dot_dimension_numbers<[1], [0], [0], [1], [0, 0, 1, 1], [], []>} : vector<8x8xbf16>, vector<8x128xbf16>, vector<8x128xf32> -> vector<8x128xf32>
    %5 = vector.broadcast %2 : vector<1x128xf32> to vector<8x128xf32>
    %6 = arith.addf %4, %5 : vector<8x128xf32>
    %cst_5 = arith.constant 0.000000e+00 : f32
    %7 = vector.broadcast %cst_5 : f32 to vector<8x128xf32>
    %8 = arith.maximumf %6, %7 : vector<8x128xf32>
    %c0_6 = arith.constant 0 : index
    %c0_7 = arith.constant 0 : index
    %9 = vector.load %arg4[%c0_6, %c0_7] : memref<128x128xbf16, #tpu.memory_space<vmem>>, vector<128x128xbf16>
    %c0_8 = arith.constant 0 : index
    %c0_9 = arith.constant 0 : index
    %10 = vector.load %arg5[%c0_8, %c0_9] : memref<1x128xf32, #tpu.memory_space<vmem>>, vector<1x128xf32>
    %11 = arith.truncf %8 : vector<8x128xf32> to vector<8x128xbf16>
    %cst_10 = arith.constant dense<0.000000e+00> : vector<8x128xf32>
    %12 = tpu.matmul %11, %9, %cst_10 {dimension_numbers = #tpu.dot_dimension_numbers<[1], [0], [0], [1], [0, 0, 1, 1], [], []>} : vector<8x128xbf16>, vector<128x128xbf16>, vector<8x128xf32> -> vector<8x128xf32>
    %13 = vector.broadcast %10 : vector<1x128xf32> to vector<8x128xf32>
    %14 = arith.addf %12, %13 : vector<8x128xf32>
    %cst_11 = arith.constant 0.000000e+00 : f32
    %15 = vector.broadcast %cst_11 : f32 to vector<8x128xf32>
    %16 = arith.maximumf %14, %15 : vector<8x128xf32>
    %c0_12 = arith.constant 0 : index
    %c0_13 = arith.constant 0 : index
    %17 = vector.load %arg6[%c0_12, %c0_13] : memref<8x128xf32, #tpu.memory_space<vmem>>, vector<8x128xf32>
    tpu.vector_store %arg6[%c0_12, %c0_13], %16 {strides = array<i32>} : memref<8x128xf32, #tpu.memory_space<vmem>>, vector<8x128xf32>,
    return
  }
  func.func @transform_0(%arg0: i32) -> (i32, i32) {
    %c0_i32 = arith.constant 0 : i32
    %c0_i32_0 = arith.constant 0 : i32
    return %arg0, %c0_i32 : i32, i32
  }
  func.func @transform_1(%arg0: i32) -> (i32, i32) {
    %c0_i32 = arith.constant 0 : i32
    %c0_i32_0 = arith.constant 0 : i32
    %c0_i32_1 = arith.constant 0 : i32
    return %c0_i32, %c0_i32_0 : i32, i32
  }
  func.func @transform_2(%arg0: i32) -> (i32, i32) {
    %c0_i32 = arith.constant 0 : i32
    %c0_i32_0 = arith.constant 0 : i32
    %c0_i32_1 = arith.constant 0 : i32
    return %c0_i32, %c0_i32_0 : i32, i32
  }
  func.func @transform_3(%arg0: i32) -> (i32, i32) {
    %c0_i32 = arith.constant 0 : i32
    %c0_i32_0 = arith.constant 0 : i32
    %c0_i32_1 = arith.constant 0 : i32
    return %c0_i32, %c0_i32_0 : i32, i32
  }
  func.func @transform_4(%arg0: i32) -> (i32, i32) {
    %c0_i32 = arith.constant 0 : i32
    %c0_i32_0 = arith.constant 0 : i32
    %c0_i32_1 = arith.constant 0 : i32
    return %c0_i32, %c0_i32_0 : i32, i32
  }
  func.func @transform_5(%arg0: i32) -> (i32, i32) {
    %c0_i32 = arith.constant 0 : i32
    %c0_i32_0 = arith.constant 0 : i32
    return %arg0, %c0_i32 : i32, i32
  }
}

</mosaic_0001>

<llo_original>
// kernel: _mlp_forward.1
$region0: #{_mlp_forward.1}
  #allocation0 [shape = 'u32[]', space=smem, size = 0x4, offset = 0x4, fixed_abs, tag = 'smem constant byte address 0x4 - core index']
  #allocation1 [shape = 'u32[144,128]{1,0:T(1,128)}', space=vmem, size = 0x12000, scoped, tag = 'internal scratch']
  %s0 = inlined_call_operand.vmem [shape: f32[8,8], index: 0, kind: input, shape index: {}]
  %s1 = inlined_call_operand.vmem [shape: bf16[8,128], index: 1, kind: input, shape index: {}]
  %s2 = inlined_call_operand.vmem [shape: f32[1,128], index: 2, kind: input, shape index: {}]
  %s3 = inlined_call_operand.hbm [shape: bf16[128,128], index: 3, kind: input, shape index: {}]
  %s4 = inlined_call_operand.vmem [shape: f32[1,128], index: 4, kind: input, shape index: {}]
  %s5 = inlined_call_operand.vmem [shape: f32[8,128], index: 5, kind: output, shape index: {}]
  %s6 = sld [smem:[#allocation0]]
  $region34: #{_mlp_forward.1} parent=0
    _
  %s8 = ssub.s32 1, %s6
  %s9 = scalar_select 0, %s8, %s6
  $region1: #{_mlp_forward.1} parent=0
    #allocation2 [shape = 'u8[32768]{0}', space=vmem, size = 0x8000, scoped, tag = 'input window, operand 3, single buffered']
    #allocation3 [shape = 's32[1]{0}', space=sflag, size = 0x4, scoped, tag = 'scoped memory for _mlp_forward.1']
    %10 = vsyncpa [#allocation3], 0
    // Predicated region
    $region2: #{_mlp_forward.1} parent=1 // pred_check
      _
    $region3: #{_mlp_forward.1} parent=1 // pred_check_branch
      %12 = sbr.rel (0) target = $region5
    $region4: #{_mlp_forward.1} parent=1 // pred_region
      _
    $region5: #{_mlp_forward.1} parent=1 // pred_fallthru
      _
    // Predicated region
    $region6: #{_mlp_forward.1} parent=1 // pred_check
      _
    $region7: #{_mlp_forward.1} parent=1 // pred_check_branch
      %14 = sbr.rel (0) target = $region9
    $region8: #{_mlp_forward.1} parent=1 // pred_region
      _
    $region9: #{_mlp_forward.1} parent=1 // pred_fallthru
      _
    // Predicated region
    $region10: #{_mlp_forward.1} parent=1 // pred_check
      _
    $region11: #{_mlp_forward.1} parent=1 // pred_check_branch
      %16 = sbr.rel (0) target = $region13
    $region12: #{_mlp_forward.1} parent=1 // pred_region
      _
    $region13: #{_mlp_forward.1} parent=1 // pred_fallthru
      _
    // Predicated region
    $region14: #{_mlp_forward.1} parent=1 // pred_check
      _
    $region15: #{_mlp_forward.1} parent=1 // pred_check_branch
      %18 = sbr.rel (0) target = $region17
    $region16: #{_mlp_forward.1} parent=1 // pred_region
      %s20 = ssub.s32 1024, 1024
      %21 = vsyncadd [#allocation3], %s20
      %s22 = sshll.u32 [#allocation2], 4
      %s23 = int_to_ptr.vmem [resolvable:$true] %s22
      %28 = dma.hbm_to_vmem [thread:$0]  %s3, 1024, %s23, [#allocation3], 64, 64, 4
    $region17: #{_mlp_forward.1} parent=1 // pred_fallthru
      _
    // Predicated region
    $region18: #{_mlp_forward.1} parent=1 // pred_check
      _
    $region19: #{_mlp_forward.1} parent=1 // pred_check_branch
      %30 = sbr.rel (0) target = $region21
    $region20: #{_mlp_forward.1} parent=1 // pred_region
      _
    $region21: #{_mlp_forward.1} parent=1 // pred_fallthru
      _
    // Predicated region
    $region22: #{_mlp_forward.1} parent=1 // pred_check
      _
    $region23: #{_mlp_forward.1} parent=1 // pred_check_branch
      %32 = sbr.rel (0) target = $region25
    $region24: #{_mlp_forward.1} parent=1 // pred_region
      %33 = dma.done [#allocation3], 1024
    $region25: #{_mlp_forward.1} parent=1 // pred_fallthru
      _
    %v35 = vld [vmem:[%s0] sm:$0xff]
    %v36 = vld [vmem:[%s1] sm:$0xf]
    %v37 = vld [vmem:[%s2] sm:$0x1]
    %v38 = vpack.c.bf16 %v35, %v35
    %v40 = vlaneseq
    %v41 = vshrl.u32 %v40, 7
    %v42 = vsub.s32 0, %v41
    %v43 = vrot.slane %v37, %v42
    %vm45 = vcmask 64512
    %v47 = vsel %vm45, %v38, 0
    %vm49 = vcmask 1043456
    %v51 = vsel %vm49, %v36, 0
    %53 = vmatprep.subr.bf16.mxu0 0
    %54 = vmatpush1.bf16.msra.mxu0 %v51
    %55 = vmatprep.subr.bf16.mxu0 0
    %56 = vmatpush1.bf16.msra.mxu0 0
    %57 = vmatprep.subr.bf16.mxu0 0
    %58 = vmatpush1.bf16.msra.mxu0 0
    %59 = vmatprep.subr.bf16.mxu0 0
    %60 = vmatpush1.bf16.msra.mxu0 0
    %61 = vmatprep.subr.bf16.mxu0 0
    %62 = vmatpush1.bf16.msra.mxu0 0
    %63 = vmatprep.subr.bf16.mxu0 0
    %64 = vmatpush1.bf16.msra.mxu0 0
    %65 = vmatprep.subr.bf16.mxu0 0
    %66 = vmatpush1.bf16.msra.mxu0 0
    %67 = vmatprep.subr.bf16.mxu0 0
    %68 = vmatpush1.bf16.msra.mxu0 0
    %69 = vmatprep.subr.bf16.mxu0 0
    %70 = vmatpush1.bf16.msra.mxu0 0
    %71 = vmatprep.subr.bf16.mxu0 0
    %72 = vmatpush1.bf16.msra.mxu0 0
    %73 = vmatprep.subr.bf16.mxu0 0
    %74 = vmatpush1.bf16.msra.mxu0 0
    %75 = vmatprep.subr.bf16.mxu0 0
    %76 = vmatpush1.bf16.msra.mxu0 0
    %77 = vmatprep.subr.bf16.mxu0 0
    %78 = vmatpush1.bf16.msra.mxu0 0
    %79 = vmatprep.subr.bf16.mxu0 0
    %80 = vmatpush1.bf16.msra.mxu0 0
    %81 = vmatprep.subr.bf16.mxu0 0
    %82 = vmatpush1.bf16.msra.mxu0 0
    %83 = vmatprep.subr.bf16.mxu0 0
    %84 = vmatpush1.bf16.msra.mxu0 0
    %85 = vmatprep.mubr.bf16.mxu0 0
    %86 = vmatmul.mubr.bf16.gmra.mrb[0].mxu0 %v47
    %v87 = vpop.f32.mrb[0].mxu0
    %v88 = vadd.f32 %v43, %v87
    %v89 = vpop.f32.mrb[0].mxu0
    %v90 = vpop.f32.mrb[0].mxu0
    %v91 = vpop.f32.mrb[0].mxu0
    %92 = vdwg.mxu0
    %v93 = vmax.f32 %v88, 0.0
    %v94 = vld [vmem:[#allocation2] sm:$0xf]
    %v95 = vld [vmem:[#allocation2 + $0x4] sm:$0xf]
    %v96 = vld [vmem:[#allocation2 + $0x8] sm:$0xf]
    %v97 = vld [vmem:[#allocation2 + $0xc] sm:$0xf]
    %v98 = vld [vmem:[#allocation2 + $0x10] sm:$0xf]
    %v99 = vld [vmem:[#allocation2 + $0x14] sm:$0xf]
    %v100 = vld [vmem:[#allocation2 + $0x18] sm:$0xf]
    %v101 = vld [vmem:[#allocation2 + $0x1c] sm:$0xf]
    %v102 = vld [vmem:[#allocation2 + $0x20] sm:$0xf]
    %v103 = vld [vmem:[#allocation2 + $0x24] sm:$0xf]
    %v104 = vld [vmem:[#allocation2 + $0x28] sm:$0xf]
    %v105 = vld [vmem:[#allocation2 + $0x2c] sm:$0xf]
    %v106 = vld [vmem:[#allocation2 + $0x30] sm:$0xf]
    %v107 = vld [vmem:[#allocation2 + $0x34] sm:$0xf]
    %v108 = vld [vmem:[#allocation2 + $0x38] sm:$0xf]
    %v109 = vld [vmem:[#allocation2 + $0x3c] sm:$0xf]
    %v110 = vld [vmem:[%s4] sm:$0x1]
    %v111 = vpack.c.bf16 %v93, %v93
    %v113 = vlaneseq
    %v114 = vshrl.u32 %v113, 7
    %v115 = vsub.s32 0, %v114
    %v116 = vrot.slane %v110, %v115
    %v134 = vunpack.c.l.b16 %v94
    %v135 = vunpack.c.l.b16 %v95
    %v136 = vunpack.c.l.b16 %v96
    %v137 = vunpack.c.l.b16 %v97
    %v138 = vunpack.c.l.b16 %v98
    %v139 = vunpack.c.l.b16 %v99
    %v140 = vunpack.c.l.b16 %v100
    %v141 = vunpack.c.l.b16 %v101
    %v142 = vunpack.c.l.b16 %v102
    %v143 = vunpack.c.l.b16 %v103
    %v144 = vunpack.c.l.b16 %v104
    %v145 = vunpack.c.l.b16 %v105
    %v146 = vunpack.c.l.b16 %v106
    %v147 = vunpack.c.l.b16 %v107
    %v148 = vunpack.c.l.b16 %v108
    %v149 = vunpack.c.l.b16 %v109
    %v150 = vpack.c.b16 %v135, %v134
    %v151 = vpack.c.b16 %v137, %v136
    %v152 = vpack.c.b16 %v139, %v138
    %v153 = vpack.c.b16 %v141, %v140
    %v154 = vpack.c.b16 %v143, %v142
    %v155 = vpack.c.b16 %v145, %v144
    %v156 = vpack.c.b16 %v147, %v146
    %v157 = vpack.c.b16 %v149, %v148
    %166 = vmatprep.subr.bf16.mxu0 0
    %167 = vmatpush1.bf16.msra.mxu0 %v150
    %168 = vmatprep.subr.bf16.mxu0 0
    %169 = vmatpush1.bf16.msra.mxu0 %v151
    %170 = vmatprep.subr.bf16.mxu0 0
    %171 = vmatpush1.bf16.msra.mxu0 %v152
    %172 = vmatprep.subr.bf16.mxu0 0
    %173 = vmatpush1.bf16.msra.mxu0 %v153
    %174 = vmatprep.subr.bf16.mxu0 0
    %175 = vmatpush1.bf16.msra.mxu0 %v154
    %176 = vmatprep.subr.bf16.mxu0 0
    %177 = vmatpush1.bf16.msra.mxu0 %v155
    %178 = vmatprep.subr.bf16.mxu0 0
    %179 = vmatpush1.bf16.msra.mxu0 %v156
    %180 = vmatprep.subr.bf16.mxu0 0
    %181 = vmatpush1.bf16.msra.mxu0 %v157
    %182 = vmatprep.subr.bf16.mxu0 0
    %183 = vmatpush1.bf16.msra.mxu0 0
    %184 = vmatprep.subr.bf16.mxu0 0
    %185 = vmatpush1.bf16.msra.mxu0 0
    %186 = vmatprep.subr.bf16.mxu0 0
    %187 = vmatpush1.bf16.msra.mxu0 0
    %188 = vmatprep.subr.bf16.mxu0 0
    %189 = vmatpush1.bf16.msra.mxu0 0
    %190 = vmatprep.subr.bf16.mxu0 0
    %191 = vmatpush1.bf16.msra.mxu0 0
    %192 = vmatprep.subr.bf16.mxu0 0
    %193 = vmatpush1.bf16.msra.mxu0 0
    %194 = vmatprep.subr.bf16.mxu0 0
    %195 = vmatpush1.bf16.msra.mxu0 0
    %196 = vmatprep.subr.bf16.mxu0 0
    %197 = vmatpush1.bf16.msra.mxu0 0
    %198 = vmatprep.mubr.bf16.mxu0 0
    %199 = vmatmul.mubr.bf16.gmra.mrb[0].mxu0 %v111
    %v200 = vpop.f32.mrb[0].mxu0
    %v201 = vadd.f32 %v116, %v200
    %v202 = vpop.f32.mrb[0].mxu0
    %v203 = vpop.f32.mrb[0].mxu0
    %v204 = vpop.f32.mrb[0].mxu0
    %205 = vdwg.mxu0
    %v206 = vmax.f32 %v201, 0.0
    %207 = vst [vmem:[%s5] sm:$0xff] %v206
    // Predicated region
    $region26: #{_mlp_forward.1} parent=1 // pred_check
      _
    $region27: #{_mlp_forward.1} parent=1 // pred_check_branch
      %209 = sbr.rel (0) target = $region29
    $region28: #{_mlp_forward.1} parent=1 // pred_region
      _
    $region29: #{_mlp_forward.1} parent=1 // pred_fallthru
      _
    // Predicated region
    $region30: #{_mlp_forward.1} parent=1 // pred_check
      _
    $region31: #{_mlp_forward.1} parent=1 // pred_check_branch
      %211 = sbr.rel (0) target = $region33
    $region32: #{_mlp_forward.1} parent=1 // pred_region
      _
    $region33: #{_mlp_forward.1} parent=1 // pred_fallthru
      _
    %212 = vsyncpa [#allocation3], 1

</llo_original>
